<compile_context>
chip_gen: v7x
topology: tpu7x:2x2x1
jax: 0.10.0
libtpu: 0.0.40
codegen_flags: <defaults>
</compile_context>

<pallas_src>
import math
import functools

import jax
import jax.numpy as jnp
from jax import lax
from jax.experimental import pallas as pl
from jax.experimental.pallas import tpu as pltpu


NEG_SLOPE = 0.01  # torch.nn.LeakyReLU default negative_slope


def _round_up(x, m):
    return ((x + m - 1) // m) * m


# -----------------------------------------------------------------------------
# Fused Pallas kernel:  out = leaky_relu( (x or x^T) @ w + b )
#   lhs_transposed=True : x_ref [Cin, rows]  (NCHW slab, f32; cast in-kernel)
#   lhs_transposed=False: x_ref [rows, K]    (im2col patches, bf16)
#   w_ref [K, Np] bf16, b_ref [1, Np] f32  ->  o_ref [rows, Np] f32
# -----------------------------------------------------------------------------
def _fused_matmul_kernel(x_ref, w_ref, b_ref, o_ref, *, lhs_transposed):
    x = x_ref[...]
    if x.dtype != jnp.bfloat16:
        x = x.astype(jnp.bfloat16)            # free VPU filler; MXU eats bf16
    dn = (((0,), (0,)), ((), ())) if lhs_transposed else (((1,), (0,)), ((), ()))
    acc = lax.dot_general(x, w_ref[...], dimension_numbers=dn,
                          preferred_element_type=jnp.float32)
    acc = acc + b_ref[...]                    # (rows, Np) + (1, Np) broadcast
    # Exact LeakyReLU for slope in (0,1): one VPU max.
    o_ref[...] = jnp.maximum(acc, NEG_SLOPE * acc).astype(o_ref.dtype)


# -----------------------------------------------------------------------------
# Tile selection over the per-image pixel axis (hot path)
# -----------------------------------------------------------------------------
def _choose_pixel_tile(nb, p):
    """Pick a tile size over the H*W pixel axis.

    Legality: tile must be a multiple of 128 (it is the LHS lane dim and the
    output sublane dim) or equal to the full axis.  We only pick exact divisors
    of P, so there are never ragged/masked blocks (no M pad, no post-slice).
    Preference: as large as possible (fewer ~0.35us grid steps; v5e/v6e have a
    single TensorCore) but capped well under VMEM, while keeping at least two
    total grid blocks when the problem allows it so both v7x TensorCores work.
    """
    if p % 128 != 0:
        return p                               # full-axis block: always legal
    divisors = [t for t in range(128, p + 1, 128) if p % t == 0]
    cap = 2048                                 # [Cin,2048] f32 LHS << VMEM
    fitting = [t for t in divisors if t <= cap] or [min(divisors)]
    tp = max(fitting)
    if nb * (p // tp) < 2:                     # v7x: try to feed both cores
        two_block = [t for t in fitting if nb * (p // t) >= 2]
        if two_block:
            tp = max(two_block)
    return tp


# -----------------------------------------------------------------------------
# Hot path: kernel_size == stride  (pure per-pixel matmul)
# -----------------------------------------------------------------------------
def _deconv_k_eq_s(x_nchw, w_p, b_p, *, k, cout):
    Nb, cin, H, W = x_nchw.shape
    P = H * W
    Np = w_p.shape[1]                          # k*k*cout padded to 128 lanes
    x3 = x_nchw.reshape(Nb, cin, P)            # metadata-only reshape (NCHW)
    tp = _choose_pixel_tile(Nb, P)
    grid = (Nb, P // tp)

    out = pl.pallas_call(
        functools.partial(_fused_matmul_kernel, lhs_transposed=True),
        out_shape=jax.ShapeDtypeStruct((Nb, P, Np), jnp.float32),
        grid=grid,
        in_specs=[
            # NCHW slab [cin, tp]; cin is the full dim (no K pad), tp is a
            # 128-multiple divisor of H*W (or the full axis).
            pl.BlockSpec((None, cin, tp), lambda n, p: (n, 0, p)),
            pl.BlockSpec((cin, Np), lambda n, p: (0, 0)),   # resident weight
            pl.BlockSpec((1, Np), lambda n, p: (0, 0)),     # resident bias
        ],
        out_specs=pl.BlockSpec((None, tp, Np), lambda n, p: (n, p, 0)),
        compiler_params=pltpu.CompilerParams(
            dimension_semantics=("parallel", "parallel")),
    )(x3, w_p, b_p)

    # Single fused XLA permutation: drop padded lanes, interleave the k*k
    # per-pixel block into the spatial grid AND go to NCHW in one copy.
    # (columns are ordered (kh, kw, cout): out[n,co,h*k+a,w*k+b] = res[n,hw,(a,b,co)])
    out = out[..., : k * k * cout].reshape(Nb, H, W, k, k, cout)
    out = out.transpose(0, 5, 1, 3, 2, 4).reshape(Nb, cout, H * k, W * k)
    return out


# -----------------------------------------------------------------------------
# General path: kernel_size != stride (overlapping deconv)
#   ConvTranspose2d == stride-1 conv of the zero-dilated, (k-1)-padded input
#   with the spatially flipped kernel.  im2col stays in XLA (cold path).
# -----------------------------------------------------------------------------
def _extract_patches_s1(x, k):
    """x: [N, Hp, Wp, C] -> [N, Ho, Wo, k*k*C], stride 1, minor order (kh,kw,C)."""
    _, Hp, Wp, _ = x.shape
    Ho, Wo = Hp - k + 1, Wp - k + 1
    pieces = []
    for i in range(k):
        for j in range(k):
            pieces.append(x[:, i:i + Ho, j:j + Wo, :])
    return jnp.concatenate(pieces, axis=-1)


def _matmul_bias_lrelu_rows(x_rows, w_p, b_p):
    """x_rows [M, K] bf16 (K = full, un-padded), w_p [K, Np] bf16, b_p [1, Np]
    -> [M, Np] f32.  Cold path: simple row-tiled matmul."""
    M, K = x_rows.shape
    Np = w_p.shape[1]
    tm = min(512, _round_up(M, 8))
    Mp = _round_up(M, tm)
    if Mp != M:
        # TODO(synk): cold path keeps a small M pad; the hot (k==s) path has none.
        x_rows = jnp.pad(x_rows, ((0, Mp - M), (0, 0)))
    out = pl.pallas_call(
        functools.partial(_fused_matmul_kernel, lhs_transposed=False),
        out_shape=jax.ShapeDtypeStruct((Mp, Np), jnp.float32),
        grid=(Mp // tm,),
        in_specs=[
            pl.BlockSpec((tm, K), lambda i: (i, 0)),        # K = full dim
            pl.BlockSpec((K, Np), lambda i: (0, 0)),
            pl.BlockSpec((1, Np), lambda i: (0, 0)),
        ],
        out_specs=pl.BlockSpec((tm, Np), lambda i: (i, 0)),
        compiler_params=pltpu.CompilerParams(dimension_semantics=("parallel",)),
    )(x_rows, w_p, b_p)
    return out[:M]


# -----------------------------------------------------------------------------
# Parameters / one-time preparation
# -----------------------------------------------------------------------------
def init_conv_transp_params(key, cin, cout, k):
    """Weight stored as [cin, kh, kw, cout] (PyTorch is [cin, cout, kh, kw])."""
    kk, kb = jax.random.split(key)
    scale = 1.0 / math.sqrt(cin * k * k)
    w = jax.random.uniform(kk, (cin, k, k, cout), jnp.float32, -scale, scale)
    b = jax.random.uniform(kb, (cout,), jnp.float32, -scale, scale)
    return w, b


def prepare_conv_transp(w, b, kernel_size, stride):
    """One-time weight/bias prep (reshape + lane pad + bf16 cast), hoisted out
    of the per-call forward.  K (contraction dim) is never padded."""
    cin, kh, kw, cout = w.shape
    assert kh == kernel_size and kw == kernel_size
    k, s = kernel_size, stride
    if k == s:
        wmat = w.reshape(cin, k * k * cout)        # columns ordered (kh, kw, cout)
        bvec = jnp.tile(b, k * k)
        N = k * k * cout
    else:
        wmat = jnp.flip(jnp.transpose(w, (1, 2, 0, 3)), axis=(0, 1))
        wmat = wmat.reshape(k * k * cin, cout)
        bvec = b
        N = cout
    Np = _round_up(N, 128)                         # lane-dense, unmasked stores
    w_p = jnp.pad(wmat, ((0, 0), (0, Np - N))).astype(jnp.bfloat16)
    b_p = jnp.pad(bvec, (0, Np - N)).astype(jnp.float32).reshape(1, Np)
    return {"w": w_p, "b": b_p}


# -----------------------------------------------------------------------------
# ConvTranspBlock.forward
# -----------------------------------------------------------------------------
def conv_transp_block_forward(x_nchw, w_p, b_p, *, k, s, cin, cout):
    """ConvTranspose2d(k, stride=s, padding=0) + LeakyReLU(0.01).
    x: [N, Cin, H, W] f32 -> [N, Cout, (H-1)*s+k, (W-1)*s+k] f32."""
    Nb, C, H, W = x_nchw.shape
    assert C == cin
    if k == s:
        return _deconv_k_eq_s(x_nchw, w_p, b_p, k=k, cout=cout)

    # General overlapping path (cold): dilate + pad + im2col in XLA, then the
    # same fused matmul+bias+LeakyReLU kernel.
    x = jnp.transpose(x_nchw, (0, 2, 3, 1)).astype(jnp.bfloat16)   # NHWC bf16
    Hd, Wd = (H - 1) * s + 1, (W - 1) * s + 1
    xd = jnp.zeros((Nb, Hd, Wd, cin), x.dtype).at[:, ::s, ::s, :].set(x)
    xd = jnp.pad(xd, ((0, 0), (k - 1, k - 1), (k - 1, k - 1), (0, 0)))
    patches = _extract_patches_s1(xd, k)            # [Nb, Ho, Wo, k*k*cin]
    _, Ho, Wo, K = patches.shape
    out = _matmul_bias_lrelu_rows(patches.reshape(-1, K), w_p, b_p)[:, :cout]
    out = out.reshape(Nb, Ho, Wo, cout)
    return jnp.transpose(out, (0, 3, 1, 2))         # NHWC -> NCHW


# -----------------------------------------------------------------------------
# Pure-JAX f32 reference (matches PyTorch ConvTranspose2d + LeakyReLU)
# -----------------------------------------------------------------------------
def _ref_conv_transpose_lrelu(x_nchw, w, b, k, s):
    Nb, cin, H, W = x_nchw.shape
    cout = w.shape[-1]
    Ho, Wo = (H - 1) * s + k, (W - 1) * s + k
    x = jnp.transpose(x_nchw, (0, 2, 3, 1)).astype(jnp.float32)
    contrib = jnp.einsum('nhwi,iabc->nhwabc', x, w)
    out = jnp.zeros((Nb, Ho, Wo, cout), jnp.float32)
    for a in range(k):
        for c in range(k):
            out = out.at[:, a:a + s * H:s, c:c + s * W:s, :].add(
                contrib[:, :, :, a, c, :])
    out = out + b
    out = jnp.where(out >= 0, out, NEG_SLOPE * out)
    return jnp.transpose(out, (0, 3, 1, 2))


if __name__ == "__main__":
    key = jax.random.PRNGKey(0)
    kx, kp, kx2, kp2 = jax.random.split(key, 4)

    # --- Primary config: ConvTranspBlock usage in conv_deconv.py (k == s) ----
    B, Cin, Cout, H, W = 2, 32, 16, 16, 16
    k, s = 2, 2
    x = jax.random.normal(kx, (B, Cin, H, W), jnp.float32)
    w, b = init_conv_transp_params(kp, Cin, Cout, k)
    prepped = prepare_conv_transp(w, b, k, s)       # one-time, outside the jit
    fwd = jax.jit(functools.partial(
        conv_transp_block_forward, k=k, s=s, cin=Cin, cout=Cout))
    out = jax.block_until_ready(fwd(x, prepped["w"], prepped["b"]))
    assert out.shape == (B, Cout, (H - 1) * s + k, (W - 1) * s + k), out.shape
    ref = _ref_conv_transpose_lrelu(x, w, b, k, s)
    err = float(jnp.max(jnp.abs(out - ref)))
    assert err < 5e-2, f"k==s path: max abs err vs f32 reference: {err}"

    # --- Secondary: general (kernel_size != stride) fallback path ------------
    B2, Cin2, Cout2, H2, W2 = 1, 32, 8, 5, 5
    k2, s2 = 2, 1
    x2 = jax.random.normal(kx2, (B2, Cin2, H2, W2), jnp.float32)
    w2, b2 = init_conv_transp_params(kp2, Cin2, Cout2, k2)
    prepped2 = prepare_conv_transp(w2, b2, k2, s2)
    fwd2 = jax.jit(functools.partial(
        conv_transp_block_forward, k=k2, s=s2, cin=Cin2, cout=Cout2))
    out2 = jax.block_until_ready(fwd2(x2, prepped2["w"], prepped2["b"]))
    assert out2.shape == (B2, Cout2, (H2 - 1) * s2 + k2, (W2 - 1) * s2 + k2)
    ref2 = _ref_conv_transpose_lrelu(x2, w2, b2, k2, s2)
    err2 = float(jnp.max(jnp.abs(out2 - ref2)))
    assert err2 < 5e-2, f"general path: max abs err vs f32 reference: {err2}"

    print("KERNEL_OK")
</pallas_src>

<mosaic_0001>
module attributes {stable_mosaic.version = 11 : i64} {
  func.func @_fused_matmul_kernel(%arg0: i32, %arg1: i32, %arg2: memref<1x32x256xf32, #tpu.memory_space<vmem>>, %arg3: memref<32x128xbf16, #tpu.memory_space<vmem>>, %arg4: memref<1x128xf32, #tpu.memory_space<vmem>>, %arg5: memref<1x256x128xf32, #tpu.memory_space<vmem>>) attributes {dimension_semantics = [#tpu.dimension_semantics<parallel>, #tpu.dimension_semantics<parallel>], iteration_bounds = array<i64: 2, 1>, scalar_prefetch = 0 : i64, scratch_operands = 0 : i64, tpu.core_type = #tpu.core_type<tc>, window_params = [{transform_indices = @transform_0, window_bounds = array<i64: 1, 32, 256>}, {pipeline_mode = #tpu.pipeline_mode<synchronous>, transform_indices = @transform_1, window_bounds = array<i64: 32, 128>}, {pipeline_mode = #tpu.pipeline_mode<synchronous>, transform_indices = @transform_2, window_bounds = array<i64: 1, 128>}, {transform_indices = @transform_3, window_bounds = array<i64: 1, 256, 128>}]} {
    %c0 = arith.constant 0 : index
    %c0_0 = arith.constant 0 : index
    %c0_1 = arith.constant 0 : index
    %0 = vector.load %arg2[%c0, %c0_0, %c0_1] : memref<1x32x256xf32, #tpu.memory_space<vmem>>, vector<1x32x256xf32>
    %1 = vector.shape_cast %0 : vector<1x32x256xf32> to vector<32x256xf32>
    %2 = arith.truncf %1 : vector<32x256xf32> to vector<32x256xbf16>
    %c0_2 = arith.constant 0 : index
    %c0_3 = arith.constant 0 : index
    %3 = vector.load %arg3[%c0_2, %c0_3] : memref<32x128xbf16, #tpu.memory_space<vmem>>, vector<32x128xbf16>
    %cst = arith.constant dense<0.000000e+00> : vector<256x128xf32>
    %4 = tpu.matmul %2, %3, %cst {dimension_numbers = #tpu.dot_dimension_numbers<[0], [0], [1], [1], [0, 1, 1, 1], [], []>} : vector<32x256xbf16>, vector<32x128xbf16>, vector<256x128xf32> -> vector<256x128xf32>
    %c0_4 = arith.constant 0 : index
    %c0_5 = arith.constant 0 : index
    %5 = vector.load %arg4[%c0_4, %c0_5] : memref<1x128xf32, #tpu.memory_space<vmem>>, vector<1x128xf32>
    %6 = vector.broadcast %5 : vector<1x128xf32> to vector<256x128xf32>
    %7 = arith.addf %4, %6 : vector<256x128xf32>
    %cst_6 = arith.constant 0.00999999977 : f32
    %8 = vector.broadcast %cst_6 : f32 to vector<256x128xf32>
    %9 = arith.mulf %8, %7 : vector<256x128xf32>
    %10 = arith.maximumf %7, %9 : vector<256x128xf32>
    %c0_7 = arith.constant 0 : index
    %c0_8 = arith.constant 0 : index
    %c0_9 = arith.constant 0 : index
    %11 = vector.load %arg5[%c0_7, %c0_8, %c0_9] : memref<1x256x128xf32, #tpu.memory_space<vmem>>, vector<1x256x128xf32>
    %12 = vector.shape_cast %11 : vector<1x256x128xf32> to vector<256x128xf32>
    %13 = vector.shape_cast %10 : vector<256x128xf32> to vector<1x256x128xf32>
    tpu.vector_store %arg5[%c0_7, %c0_8, %c0_9], %13 {strides = array<i32>} : memref<1x256x128xf32, #tpu.memory_space<vmem>>, vector<1x256x128xf32>,
    return
  }
  func.func @transform_0(%arg0: i32, %arg1: i32) -> (i32, i32, i32) {
    %c0_i32 = arith.constant 0 : i32
    %c0_i32_0 = arith.constant 0 : i32
    return %arg0, %c0_i32, %arg1 : i32, i32, i32
  }
  func.func @transform_1(%arg0: i32, %arg1: i32) -> (i32, i32) {
    %c0_i32 = arith.constant 0 : i32
    %c0_i32_0 = arith.constant 0 : i32
    %c0_i32_1 = arith.constant 0 : i32
    return %c0_i32, %c0_i32_0 : i32, i32
  }
  func.func @transform_2(%arg0: i32, %arg1: i32) -> (i32, i32) {
    %c0_i32 = arith.constant 0 : i32
    %c0_i32_0 = arith.constant 0 : i32
    %c0_i32_1 = arith.constant 0 : i32
    return %c0_i32, %c0_i32_0 : i32, i32
  }
  func.func @transform_3(%arg0: i32, %arg1: i32) -> (i32, i32, i32) {
    %c0_i32 = arith.constant 0 : i32
    %c0_i32_0 = arith.constant 0 : i32
    return %arg0, %arg1, %c0_i32 : i32, i32, i32
  }
}

</mosaic_0001>

<llo_original>
// kernel: conv_transp_block_forward.1
$region0: #{conv_transp_block_forward.1}
  #allocation0 [shape = 'u32[]', space=smem, size = 0x4, offset = 0x4, fixed_abs, tag = 'smem constant byte address 0x4 - core index']
  #allocation1 [shape = 'u32[144,128]{1,0:T(1,128)}', space=vmem, size = 0x12000, scoped, tag = 'internal scratch']
  %s0 = inlined_call_operand.vmem [shape: f32[2,32,256], index: 0, kind: input, shape index: {}]
  %s1 = inlined_call_operand.vmem [shape: bf16[32,128], index: 1, kind: input, shape index: {}]
  %s2 = inlined_call_operand.vmem [shape: f32[1,128], index: 2, kind: input, shape index: {}]
  %s3 = inlined_call_operand.vmem [shape: f32[2,256,128], index: 3, kind: output, shape index: {}]
  %s4 = sld [smem:[#allocation0]]
  $region45: #{conv_transp_block_forward.1} parent=0
    _
  %s6 = ssub.s32 1, %s4
  %s7 = scalar_select 0, %s6, %s4
  loop: start=0, step=1, limit=4
  $region2: #{conv_transp_block_forward.1} parent=0 // loop_pre_header
    _
  $region3: #{conv_transp_block_forward.1} parent=0 // loop_header
    %s9 = sphi 0, %s13
    %p10 = scmp.ge.s32.totalorder %s9, 4
    %s16 = sphi 0, %s28
    %s17 = sphi 0, %s24
    %s18 = sphi 0, %s16
    %s19 = sphi 0, %s17
    %s20 = sphi 0, %s18
    %s21 = sphi 0, %s19
    %s33 = sphi 0, %s35
    %s36 = sphi 0, %s33
    %s37 = sphi 0, %s36
    %s53 = sphi 0, %s37
    %s57 = sphi 0, %s57
    %s59 = sphi 0, %s57
    %s60 = sphi 0, %s59
    %s74 = sphi 0, %s60
    %s78 = sphi 0, %s78
    %s80 = sphi 0, %s78
    %s81 = sphi 0, %s80
    %s95 = sphi 0, %s81
    %s103 = sphi 0, %s105
    %s106 = sphi 0, %s103
    %s107 = sphi 0, %s106
    %s123 = sphi 0, %s107
  $region4: #{conv_transp_block_forward.1} parent=0 // loop_header_branch
    %12 = sbr.rel (%p10) target = $region8
  $region5: #{conv_transp_block_forward.1} parent=0 // loop_body
    %s14 = ssub.s32 %s9, 1
    %s15 = ssub.s32 %s9, 2
    %s22 = sadd.s32 1, %s17
    %p23 = scmp.ge.s32.totalorder %s22, 1
    %s24 = scalar_select %p23, 0, %s22
    %s25 = sadd.s32 1, %s16
    %s26 = scalar_select %p23, %s25, %s16
    %p27 = scmp.ge.s32.totalorder %s26, 2
    %s28 = scalar_select %p27, 0, %s26
    %s29 = ssub.s32 %s16, %s28
    %s30 = ssub.s32 %s17, %s24
    %s31 = sor.u32 %s29, %s30
    %p32 = scmp.eq.s32.totalorder %s31, 0
    %s34 = sadd.s32 %s33, 1
    %s35 = scalar_select %p32, %s33, %s34
    %p38 = pneg %p32
    %p39 = scmp.eq.s32.totalorder %s9, 1
    %p40 = por %p38, %p39
    %p41 = scmp.ne.s32.totalorder %s33, %s36
    %p42 = scmp.eq.s32.totalorder %s9, 0
    %p43 = por %p41, %p42
    %p44 = scmp.ne.s32.totalorder %s33, %s36
    %p45 = scmp.eq.s32.totalorder %s14, 1
    %p46 = por %p44, %p45
    %p47 = scmp.ne.s32.totalorder %s36, %s37
    %p48 = scmp.eq.s32.totalorder %s14, 0
    %p49 = por %p47, %p48
    %p50 = scmp.ne.s32.totalorder %s36, %s37
    %p51 = scmp.eq.s32.totalorder %s15, 1
    %p52 = por %p50, %p51
    %p54 = scmp.ne.s32.totalorder %s37, %s53
    %p55 = scmp.eq.s32.totalorder %s15, 0
    %p56 = por %p54, %p55
    %s58 = sadd.s32 %s57, 1
    %p61 = scmp.eq.s32.totalorder %s9, 1
    %p62 = scmp.ne.s32.totalorder %s57, %s59
    %p63 = scmp.eq.s32.totalorder %s9, 0
    %p64 = por %p62, %p63
    %p65 = scmp.ne.s32.totalorder %s57, %s59
    %p66 = scmp.eq.s32.totalorder %s14, 1
    %p67 = por %p65, %p66
    %p68 = scmp.ne.s32.totalorder %s59, %s60
    %p69 = scmp.eq.s32.totalorder %s14, 0
    %p70 = por %p68, %p69
    %p71 = scmp.ne.s32.totalorder %s59, %s60
    %p72 = scmp.eq.s32.totalorder %s15, 1
    %p73 = por %p71, %p72
    %p75 = scmp.ne.s32.totalorder %s60, %s74
    %p76 = scmp.eq.s32.totalorder %s15, 0
    %p77 = por %p75, %p76
    %s79 = sadd.s32 %s78, 1
    %p82 = scmp.eq.s32.totalorder %s9, 1
    %p83 = scmp.ne.s32.totalorder %s78, %s80
    %p84 = scmp.eq.s32.totalorder %s9, 0
    %p85 = por %p83, %p84
    %p86 = scmp.ne.s32.totalorder %s78, %s80
    %p87 = scmp.eq.s32.totalorder %s14, 1
    %p88 = por %p86, %p87
    %p89 = scmp.ne.s32.totalorder %s80, %s81
    %p90 = scmp.eq.s32.totalorder %s14, 0
    %p91 = por %p89, %p90
    %p92 = scmp.ne.s32.totalorder %s80, %s81
    %p93 = scmp.eq.s32.totalorder %s15, 1
    %p94 = por %p92, %p93
    %p96 = scmp.ne.s32.totalorder %s81, %s95
    %p97 = scmp.eq.s32.totalorder %s15, 0
    %p98 = por %p96, %p97
    %s99 = ssub.s32 %s16, %s28
    %s100 = ssub.s32 %s17, %s24
    %s101 = sor.u32 %s99, %s100
    %p102 = scmp.eq.s32.totalorder %s101, 0
    %s104 = sadd.s32 %s103, 1
    %s105 = scalar_select %p102, %s103, %s104
    %p108 = pneg %p102
    %p109 = scmp.eq.s32.totalorder %s9, 1
    %p110 = por %p108, %p109
    %p111 = scmp.ne.s32.totalorder %s103, %s106
    %p112 = scmp.eq.s32.totalorder %s9, 0
    %p113 = por %p111, %p112
    %p114 = scmp.ne.s32.totalorder %s103, %s106
    %p115 = scmp.eq.s32.totalorder %s14, 1
    %p116 = por %p114, %p115
    %p117 = scmp.ne.s32.totalorder %s106, %s107
    %p118 = scmp.eq.s32.totalorder %s14, 0
    %p119 = por %p117, %p118
    %p120 = scmp.ne.s32.totalorder %s106, %s107
    %p121 = scmp.eq.s32.totalorder %s15, 1
    %p122 = por %p120, %p121
    %p124 = scmp.ne.s32.totalorder %s107, %s123
    %p125 = scmp.eq.s32.totalorder %s15, 0
    %p126 = por %p124, %p125
    %p127 = scmp.le.s32.totalorder 1, %s9
    %p128 = scmp.lt.s32.totalorder %s9, 3
    %p129 = pnand %p127, %p128
    %p130 = pneg %p129
    // Predicated region
    $region9: #{conv_transp_block_forward.1} parent=5 // pred_check
      _
    $region10: #{conv_transp_block_forward.1} parent=5 // pred_check_branch
      %132 = sbr.rel (%p129) target = $region12
    $region11: #{conv_transp_block_forward.1} parent=5 // pred_region
      %s133 = ssub.s32 %s9, 1
      // Predicated region
      $region13: #{conv_transp_block_forward.1} parent=11 // pred_check
        %p134 = pneg %p70
      $region14: #{conv_transp_block_forward.1} parent=11 // pred_check_branch
        %136 = sbr.rel (%p134) target = $region16
      $region15: #{conv_transp_block_forward.1} parent=11 // pred_region
        _
      $region16: #{conv_transp_block_forward.1} parent=11 // pred_fallthru
        _
      // Predicated region
      $region17: #{conv_transp_block_forward.1} parent=11 // pred_check
        %p137 = pneg %p91
      $region18: #{conv_transp_block_forward.1} parent=11 // pred_check_branch
        %139 = sbr.rel (%p137) target = $region20
      $region19: #{conv_transp_block_forward.1} parent=11 // pred_region
        _
      $region20: #{conv_transp_block_forward.1} parent=11 // pred_fallthru
        _
    $region12: #{conv_transp_block_forward.1} parent=5 // pred_fallthru
      _
    %p140 = scmp.lt.s32.totalorder %s9, 2
    // Predicated region
    $region21: #{conv_transp_block_forward.1} parent=5 // pred_check
      %p141 = pneg %p140
    $region22: #{conv_transp_block_forward.1} parent=5 // pred_check_branch
      %143 = sbr.rel (%p141) target = $region24
    $region23: #{conv_transp_block_forward.1} parent=5 // pred_region
      // Predicated region
      $region25: #{conv_transp_block_forward.1} parent=23 // pred_check
        %p144 = pneg %p43
      $region26: #{conv_transp_block_forward.1} parent=23 // pred_check_branch
        %146 = sbr.rel (%p144) target = $region28
      $region27: #{conv_transp_block_forward.1} parent=23 // pred_region
        %s147 = smul.u32 2, %s17
        %p148 = scmp.lt.s32.totalorder %s16, 1
        %s149 = scalar_select %p148, %s16, 1
        %p150 = scmp.lt.s32.totalorder %s147, 1
        %s151 = scalar_select %p150, %s147, 1
        %s152 = smul.addr %s149, 8
        %s153 = sadd.s32 %s151, %s152
        %s154 = smul.addr %s153, 8
        %s155 = scalar_lea.vmem %s0, %s154
        %s156 = smul.u32 2, %s17
      $region28: #{conv_transp_block_forward.1} parent=23 // pred_fallthru
        _
    $region24: #{conv_transp_block_forward.1} parent=5 // pred_fallthru
      _
    %p157 = scmp.le.s32.totalorder 1, %s9
    %p158 = scmp.lt.s32.totalorder %s9, 3
    %p159 = pnand %p157, %p158
    %p160 = pneg %p159
    // Predicated region
    $region29: #{conv_transp_block_forward.1} parent=5 // pred_check
      _
    $region30: #{conv_transp_block_forward.1} parent=5 // pred_check_branch
      %162 = sbr.rel (%p159) target = $region32
    $region31: #{conv_transp_block_forward.1} parent=5 // pred_region
      %s163 = ssub.s32 %s9, 1
      %s164 = smul.u32 2, %s19
      %p165 = scmp.lt.s32.totalorder %s18, 1
      %s166 = scalar_select %p165, %s18, 1
      %p167 = scmp.lt.s32.totalorder %s164, 1
      %s168 = scalar_select %p167, %s164, 1
      %s169 = smul.addr %s166, 8
      %s170 = sadd.s32 %s168, %s169
      %s171 = smul.addr %s170, 8
      %s172 = scalar_lea.vmem %s0, %s171
      %p173 = pneg %p49
      %p174 = pneg %p46
      %p175 = pneg %p70
      %p176 = pneg %p67
      %p177 = pneg %p91
      %p178 = pneg %p88
      %p179 = pneg %p119
      %p180 = pneg %p116
      %s181 = smul.u32 32, %s19
      %p182 = scmp.lt.s32.totalorder %s18, 1
      %s183 = scalar_select %p182, %s18, 1
      %p184 = scmp.lt.s32.totalorder %s181, 31
      %s185 = scalar_select %p184, %s181, 31
      %s186 = smul.addr %s183, 32
      %s187 = sadd.s32 %s185, %s186
      %s188 = smul.addr %s187, 8
      %s189 = scalar_lea.vmem %s3, %s188
      %s190 = smul.u32 2, %s19
      %p191 = scmp.lt.s32.totalorder %s18, 1
      %s192 = scalar_select %p191, %s18, 1
      %p193 = scmp.lt.s32.totalorder %s190, 1
      %s194 = scalar_select %p193, %s190, 1
      %s195 = smul.addr %s192, 8
      %s196 = sadd.s32 %s194, %s195
      %s197 = smul.addr %s196, 8
      %s198 = scalar_lea.vmem %s0, %s197
      %s199 = smul.u32 2, %s19
      %s200 = smul.u32 32, %s19
      %p201 = scmp.lt.s32.totalorder %s18, 1
      %s202 = scalar_select %p201, %s18, 1
      %p203 = scmp.lt.s32.totalorder %s200, 31
      %s204 = scalar_select %p203, %s200, 31
      %s205 = smul.addr %s202, 32
      %s206 = sadd.s32 %s204, %s205
      %s207 = smul.addr %s206, 8
      %s208 = scalar_lea.vmem %s3, %s207
      %s209 = smul.u32 32, %s19
      %v211 = vld [vmem:[%s198] sm:$0xff]
      %v212 = vld [vmem:[%s198 + $0x8] sm:$0xff]
      %v213 = vld [vmem:[%s198 + $0x10] sm:$0xff]
      %v214 = vld [vmem:[%s198 + $0x18] sm:$0xff]
      %v215 = vld [vmem:[%s198 + $0x20] sm:$0xff]
      %v216 = vld [vmem:[%s198 + $0x28] sm:$0xff]
      %v217 = vld [vmem:[%s198 + $0x30] sm:$0xff]
      %v218 = vld [vmem:[%s198 + $0x38] sm:$0xff]
      %v219 = vpack.c.bf16 %v213, %v211
      %v220 = vpack.c.bf16 %v214, %v212
      %v221 = vpack.c.bf16 %v217, %v215
      %v222 = vpack.c.bf16 %v218, %v216
      %v223 = vld [vmem:[%s1] sm:$0xf]
      %v224 = vld [vmem:[%s1 + $0x4] sm:$0xf]
      %v225 = vld [vmem:[%s1 + $0x8] sm:$0xf]
      %v226 = vld [vmem:[%s1 + $0xc] sm:$0xf]
      %v227 = vld [vmem:[%s2] sm:$0x1]
      %v229 = vlaneseq
      %v230 = vshrl.u32 %v229, 7
      %v231 = vsub.s32 0, %v230
      %v232 = vrot.slane %v227, %v231
      %234 = vxpose.xlu0.c.b16.start [1/8] %v219, 128
      %235 = vxpose.xlu0.c.b16.cont [2/8] %v221, 128
      %236 = vxpose.xlu0.c.b16.cont [3/8] 0, 128
      %237 = vxpose.xlu0.c.b16.cont [4/8] 0, 128
      %238 = vxpose.xlu0.c.b16.cont [5/8] 0, 128
      %239 = vxpose.xlu0.c.b16.cont [6/8] 0, 128
      %240 = vxpose.xlu0.c.b16.cont [7/8] 0, 128
      %241 = vxpose.xlu0.c.b16.end [8/8] 0, 128
      %v242 = vpop.trf.xlu0
      %v243 = vpop.trf.xlu0
      %v244 = vpop.trf.xlu0
      %v245 = vpop.trf.xlu0
      %v246 = vpop.trf.xlu0
      %v247 = vpop.trf.xlu0
      %v248 = vpop.trf.xlu0
      %v249 = vpop.trf.xlu0
      %250 = vxpose.xlu0.c.b16.start [1/8] %v220, 128
      %251 = vxpose.xlu0.c.b16.cont [2/8] %v222, 128
      %252 = vxpose.xlu0.c.b16.cont [3/8] 0, 128
      %253 = vxpose.xlu0.c.b16.cont [4/8] 0, 128
      %254 = vxpose.xlu0.c.b16.cont [5/8] 0, 128
      %255 = vxpose.xlu0.c.b16.cont [6/8] 0, 128
      %256 = vxpose.xlu0.c.b16.cont [7/8] 0, 128
      %257 = vxpose.xlu0.c.b16.end [8/8] 0, 128
      %v258 = vpop.trf.xlu0
      %v259 = vpop.trf.xlu0
      %v260 = vpop.trf.xlu0
      %v261 = vpop.trf.xlu0
      %v262 = vpop.trf.xlu0
      %v263 = vpop.trf.xlu0
      %v264 = vpop.trf.xlu0
      %v265 = vpop.trf.xlu0
      %v270 = vunpack.c.l.b16 %v223
      %v271 = vunpack.c.l.b16 %v224
      %v272 = vunpack.c.l.b16 %v225
      %v273 = vunpack.c.l.b16 %v226
      %v274 = vpack.c.b16 %v271, %v270
      %v275 = vpack.c.b16 %v273, %v272
      %vm278 = vcmask 261120
      %v280 = vsel %vm278, %v242, 0
      %v283 = vsel %vm278, %v243, 0
      %v286 = vsel %vm278, %v244, 0
      %v289 = vsel %vm278, %v245, 0
      %v292 = vsel %vm278, %v246, 0
      %v295 = vsel %vm278, %v247, 0
      %v298 = vsel %vm278, %v248, 0
      %v301 = vsel %vm278, %v249, 0
      %v304 = vsel %vm278, %v258, 0
      %v307 = vsel %vm278, %v259, 0
      %v310 = vsel %vm278, %v260, 0
      %v313 = vsel %vm278, %v261, 0
      %v316 = vsel %vm278, %v262, 0
      %v319 = vsel %vm278, %v263, 0
      %v322 = vsel %vm278, %v264, 0
      %v325 = vsel %vm278, %v265, 0
      %327 = vmatprep.subr.bf16.mxu0 0
      %328 = vmatpush1.bf16.msra.mxu0 %v274
      %329 = vmatprep.subr.bf16.mxu0 0
      %330 = vmatpush1.bf16.msra.mxu0 %v275
      %331 = vmatprep.subr.bf16.mxu0 0
      %332 = vmatpush1.bf16.msra.mxu0 0
      %333 = vmatprep.subr.bf16.mxu0 0
      %334 = vmatpush1.bf16.msra.mxu0 0
      %335 = vmatprep.subr.bf16.mxu0 0
      %336 = vmatpush1.bf16.msra.mxu0 0
      %337 = vmatprep.subr.bf16.mxu0 0
      %338 = vmatpush1.bf16.msra.mxu0 0
      %339 = vmatprep.subr.bf16.mxu0 0
      %340 = vmatpush1.bf16.msra.mxu0 0
      %341 = vmatprep.subr.bf16.mxu0 0
      %342 = vmatpush1.bf16.msra.mxu0 0
      %343 = vmatprep.subr.bf16.mxu0 0
      %344 = vmatpush1.bf16.msra.mxu0 0
      %345 = vmatprep.subr.bf16.mxu0 0
      %346 = vmatpush1.bf16.msra.mxu0 0
      %347 = vmatprep.subr.bf16.mxu0 0
      %348 = vmatpush1.bf16.msra.mxu0 0
      %349 = vmatprep.subr.bf16.mxu0 0
      %350 = vmatpush1.bf16.msra.mxu0 0
      %351 = vmatprep.subr.bf16.mxu0 0
      %352 = vmatpush1.bf16.msra.mxu0 0
      %353 = vmatprep.subr.bf16.mxu0 0
      %354 = vmatpush1.bf16.msra.mxu0 0
      %355 = vmatprep.subr.bf16.mxu0 0
      %356 = vmatpush1.bf16.msra.mxu0 0
      %357 = vmatprep.subr.bf16.mxu0 0
      %358 = vmatpush1.bf16.msra.mxu0 0
      %359 = vmatprep.mubr.bf16.mxu0 0
      %360 = vmatmul.mubr.bf16.gmra.mrb[0].mxu0 %v280
      %v361 = vpop.f32.mrb[0].mxu0
      %v362 = vadd.f32 %v232, %v361
      %v363 = vpop.f32.mrb[0].mxu0
      %v364 = vpop.f32.mrb[0].mxu0
      %v365 = vadd.f32 %v232, %v364
      %v366 = vpop.f32.mrb[0].mxu0
      %367 = vmatprep.mubr.bf16.mxu0 0
      %368 = vmatmul.mubr.bf16.gmra.mrb[0].mxu0 %v283
      %v369 = vpop.f32.mrb[0].mxu0
      %v370 = vadd.f32 %v232, %v369
      %v371 = vpop.f32.mrb[0].mxu0
      %v372 = vpop.f32.mrb[0].mxu0
      %v373 = vadd.f32 %v232, %v372
      %v374 = vpop.f32.mrb[0].mxu0
      %375 = vmatprep.mubr.bf16.mxu0 0
      %376 = vmatmul.mubr.bf16.gmra.mrb[0].mxu0 %v286
      %v377 = vpop.f32.mrb[0].mxu0
      %v378 = vadd.f32 %v232, %v377
      %v379 = vpop.f32.mrb[0].mxu0
      %v380 = vpop.f32.mrb[0].mxu0
      %v381 = vadd.f32 %v232, %v380
      %v382 = vpop.f32.mrb[0].mxu0
      %383 = vmatprep.mubr.bf16.mxu0 0
      %384 = vmatmul.mubr.bf16.gmra.mrb[0].mxu0 %v289
      %v385 = vpop.f32.mrb[0].mxu0
      %v386 = vadd.f32 %v232, %v385
      %v387 = vpop.f32.mrb[0].mxu0
      %v388 = vpop.f32.mrb[0].mxu0
      %v389 = vadd.f32 %v232, %v388
      %v390 = vpop.f32.mrb[0].mxu0
      %391 = vmatprep.mubr.bf16.mxu0 0
      %392 = vmatmul.mubr.bf16.gmra.mrb[0].mxu0 %v292
      %v393 = vpop.f32.mrb[0].mxu0
      %v394 = vadd.f32 %v232, %v393
      %v395 = vpop.f32.mrb[0].mxu0
      %v396 = vpop.f32.mrb[0].mxu0
      %v397 = vadd.f32 %v232, %v396
      %v398 = vpop.f32.mrb[0].mxu0
      %399 = vmatprep.mubr.bf16.mxu0 0
      %400 = vmatmul.mubr.bf16.gmra.mrb[0].mxu0 %v295
      %v401 = vpop.f32.mrb[0].mxu0
      %v402 = vadd.f32 %v232, %v401
      %v403 = vpop.f32.mrb[0].mxu0
      %v404 = vpop.f32.mrb[0].mxu0
      %v405 = vadd.f32 %v232, %v404
      %v406 = vpop.f32.mrb[0].mxu0
      %407 = vmatprep.mubr.bf16.mxu0 0
      %408 = vmatmul.mubr.bf16.gmra.mrb[0].mxu0 %v298
      %v409 = vpop.f32.mrb[0].mxu0
      %v410 = vadd.f32 %v232, %v409
      %v411 = vpop.f32.mrb[0].mxu0
      %v412 = vpop.f32.mrb[0].mxu0
      %v413 = vadd.f32 %v232, %v412
      %v414 = vpop.f32.mrb[0].mxu0
      %415 = vmatprep.mubr.bf16.mxu0 0
      %416 = vmatmul.mubr.bf16.gmra.mrb[0].mxu0 %v301
      %v417 = vpop.f32.mrb[0].mxu0
      %v418 = vadd.f32 %v232, %v417
      %v419 = vpop.f32.mrb[0].mxu0
      %v420 = vpop.f32.mrb[0].mxu0
      %v421 = vadd.f32 %v232, %v420
      %v422 = vpop.f32.mrb[0].mxu0
      %423 = vmatprep.mubr.bf16.mxu0 0
      %424 = vmatmul.mubr.bf16.gmra.mrb[0].mxu0 %v304
      %v425 = vpop.f32.mrb[0].mxu0
      %v426 = vadd.f32 %v232, %v425
      %v427 = vpop.f32.mrb[0].mxu0
      %v428 = vpop.f32.mrb[0].mxu0
      %v429 = vadd.f32 %v232, %v428
      %v430 = vpop.f32.mrb[0].mxu0
      %431 = vmatprep.mubr.bf16.mxu0 0
      %432 = vmatmul.mubr.bf16.gmra.mrb[0].mxu0 %v307
      %v433 = vpop.f32.mrb[0].mxu0
      %v434 = vadd.f32 %v232, %v433
      %v435 = vpop.f32.mrb[0].mxu0
      %v436 = vpop.f32.mrb[0].mxu0
      %v437 = vadd.f32 %v232, %v436
      %v438 = vpop.f32.mrb[0].mxu0
      %439 = vmatprep.mubr.bf16.mxu0 0
      %440 = vmatmul.mubr.bf16.gmra.mrb[0].mxu0 %v310
      %v441 = vpop.f32.mrb[0].mxu0
      %v442 = vadd.f32 %v232, %v441
      %v443 = vpop.f32.mrb[0].mxu0
      %v444 = vpop.f32.mrb[0].mxu0
      %v445 = vadd.f32 %v232, %v444
      %v446 = vpop.f32.mrb[0].mxu0
      %447 = vmatprep.mubr.bf16.mxu0 0
      %448 = vmatmul.mubr.bf16.gmra.mrb[0].mxu0 %v313
      %v449 = vpop.f32.mrb[0].mxu0
      %v450 = vadd.f32 %v232, %v449
      %v451 = vpop.f32.mrb[0].mxu0
      %v452 = vpop.f32.mrb[0].mxu0
      %v453 = vadd.f32 %v232, %v452
      %v454 = vpop.f32.mrb[0].mxu0
      %455 = vmatprep.mubr.bf16.mxu0 0
      %456 = vmatmul.mubr.bf16.gmra.mrb[0].mxu0 %v316
      %v457 = vpop.f32.mrb[0].mxu0
      %v458 = vadd.f32 %v232, %v457
      %v459 = vpop.f32.mrb[0].mxu0
      %v460 = vpop.f32.mrb[0].mxu0
      %v461 = vadd.f32 %v232, %v460
      %v462 = vpop.f32.mrb[0].mxu0
      %463 = vmatprep.mubr.bf16.mxu0 0
      %464 = vmatmul.mubr.bf16.gmra.mrb[0].mxu0 %v319
      %v465 = vpop.f32.mrb[0].mxu0
      %v466 = vadd.f32 %v232, %v465
      %v467 = vpop.f32.mrb[0].mxu0
      %v468 = vpop.f32.mrb[0].mxu0
      %v469 = vadd.f32 %v232, %v468
      %v470 = vpop.f32.mrb[0].mxu0
      %471 = vmatprep.mubr.bf16.mxu0 0
      %472 = vmatmul.mubr.bf16.gmra.mrb[0].mxu0 %v322
      %v473 = vpop.f32.mrb[0].mxu0
      %v474 = vadd.f32 %v232, %v473
      %v475 = vpop.f32.mrb[0].mxu0
      %v476 = vpop.f32.mrb[0].mxu0
      %v477 = vadd.f32 %v232, %v476
      %v478 = vpop.f32.mrb[0].mxu0
      %479 = vmatprep.mubr.bf16.mxu0 0
      %480 = vmatmul.mubr.bf16.gmra.mrb[0].mxu0 %v325
      %v481 = vpop.f32.mrb[0].mxu0
      %v482 = vadd.f32 %v232, %v481
      %v483 = vpop.f32.mrb[0].mxu0
      %v484 = vpop.f32.mrb[0].mxu0
      %v485 = vadd.f32 %v232, %v484
      %v486 = vpop.f32.mrb[0].mxu0
      %487 = vdwg.mxu0
      %v488 = vmul.f32 %v362, 0.01
      %v489 = vmul.f32 %v365, 0.01
      %v490 = vmul.f32 %v370, 0.01
      %v491 = vmul.f32 %v373, 0.01
      %v492 = vmul.f32 %v378, 0.01
      %v493 = vmul.f32 %v381, 0.01
      %v494 = vmul.f32 %v386, 0.01
      %v495 = vmul.f32 %v389, 0.01
      %v496 = vmul.f32 %v394, 0.01
      %v497 = vmul.f32 %v397, 0.01
      %v498 = vmul.f32 %v402, 0.01
      %v499 = vmul.f32 %v405, 0.01
      %v500 = vmul.f32 %v410, 0.01
      %v501 = vmul.f32 %v413, 0.01
      %v502 = vmul.f32 %v418, 0.01
      %v503 = vmul.f32 %v421, 0.01
      %v504 = vmul.f32 %v426, 0.01
      %v505 = vmul.f32 %v429, 0.01
      %v506 = vmul.f32 %v434, 0.01
      %v507 = vmul.f32 %v437, 0.01
      %v508 = vmul.f32 %v442, 0.01
      %v509 = vmul.f32 %v445, 0.01
      %v510 = vmul.f32 %v450, 0.01
      %v511 = vmul.f32 %v453, 0.01
      %v512 = vmul.f32 %v458, 0.01
      %v513 = vmul.f32 %v461, 0.01
      %v514 = vmul.f32 %v466, 0.01
      %v515 = vmul.f32 %v469, 0.01
      %v516 = vmul.f32 %v474, 0.01
      %v517 = vmul.f32 %v477, 0.01
      %v518 = vmul.f32 %v482, 0.01
      %v519 = vmul.f32 %v485, 0.01
      %v520 = vmax.f32 %v362, %v488
      %v521 = vmax.f32 %v365, %v489
      %v522 = vmax.f32 %v370, %v490
      %v523 = vmax.f32 %v373, %v491
      %v524 = vmax.f32 %v378, %v492
      %v525 = vmax.f32 %v381, %v493
      %v526 = vmax.f32 %v386, %v494
      %v527 = vmax.f32 %v389, %v495
      %v528 = vmax.f32 %v394, %v496
      %v529 = vmax.f32 %v397, %v497
      %v530 = vmax.f32 %v402, %v498
      %v531 = vmax.f32 %v405, %v499
      %v532 = vmax.f32 %v410, %v500
      %v533 = vmax.f32 %v413, %v501
      %v534 = vmax.f32 %v418, %v502
      %v535 = vmax.f32 %v421, %v503
      %v536 = vmax.f32 %v426, %v504
      %v537 = vmax.f32 %v429, %v505
      %v538 = vmax.f32 %v434, %v506
      %v539 = vmax.f32 %v437, %v507
      %v540 = vmax.f32 %v442, %v508
      %v541 = vmax.f32 %v445, %v509
      %v542 = vmax.f32 %v450, %v510
      %v543 = vmax.f32 %v453, %v511
      %v544 = vmax.f32 %v458, %v512
      %v545 = vmax.f32 %v461, %v513
      %v546 = vmax.f32 %v466, %v514
      %v547 = vmax.f32 %v469, %v515
      %v548 = vmax.f32 %v474, %v516
      %v549 = vmax.f32 %v477, %v517
      %v550 = vmax.f32 %v482, %v518
      %v551 = vmax.f32 %v485, %v519
      %552 = vst [vmem:[%s208] sm:$0xff] %v520
      %553 = vst [vmem:[%s208 + $0x8] sm:$0xff] %v521
      %554 = vst [vmem:[%s208 + $0x10] sm:$0xff] %v522
      %555 = vst [vmem:[%s208 + $0x18] sm:$0xff] %v523
      %556 = vst [vmem:[%s208 + $0x20] sm:$0xff] %v524
      %557 = vst [vmem:[%s208 + $0x28] sm:$0xff] %v525
      %558 = vst [vmem:[%s208 + $0x30] sm:$0xff] %v526
      %559 = vst [vmem:[%s208 + $0x38] sm:$0xff] %v527
      %560 = vst [vmem:[%s208 + $0x40] sm:$0xff] %v528
      %561 = vst [vmem:[%s208 + $0x48] sm:$0xff] %v529
      %562 = vst [vmem:[%s208 + $0x50] sm:$0xff] %v530
      %563 = vst [vmem:[%s208 + $0x58] sm:$0xff] %v531
      %564 = vst [vmem:[%s208 + $0x60] sm:$0xff] %v532
      %565 = vst [vmem:[%s208 + $0x68] sm:$0xff] %v533
      %566 = vst [vmem:[%s208 + $0x70] sm:$0xff] %v534
      %567 = vst [vmem:[%s208 + $0x78] sm:$0xff] %v535
      %568 = vst [vmem:[%s208 + $0x80] sm:$0xff] %v536
      %569 = vst [vmem:[%s208 + $0x88] sm:$0xff] %v537
      %570 = vst [vmem:[%s208 + $0x90] sm:$0xff] %v538
      %571 = vst [vmem:[%s208 + $0x98] sm:$0xff] %v539
      %572 = vst [vmem:[%s208 + $0xa0] sm:$0xff] %v540
      %573 = vst [vmem:[%s208 + $0xa8] sm:$0xff] %v541
      %574 = vst [vmem:[%s208 + $0xb0] sm:$0xff] %v542
      %575 = vst [vmem:[%s208 + $0xb8] sm:$0xff] %v543
      %576 = vst [vmem:[%s208 + $0xc0] sm:$0xff] %v544
      %577 = vst [vmem:[%s208 + $0xc8] sm:$0xff] %v545
      %578 = vst [vmem:[%s208 + $0xd0] sm:$0xff] %v546
      %579 = vst [vmem:[%s208 + $0xd8] sm:$0xff] %v547
      %580 = vst [vmem:[%s208 + $0xe0] sm:$0xff] %v548
      %581 = vst [vmem:[%s208 + $0xe8] sm:$0xff] %v549
      %582 = vst [vmem:[%s208 + $0xf0] sm:$0xff] %v550
      %583 = vst [vmem:[%s208 + $0xf8] sm:$0xff] %v551
      %s584 = smul.u32 32, %s19
      %p585 = scmp.lt.s32.totalorder %s18, 1
      %s586 = scalar_select %p585, %s18, 1
      %p587 = scmp.lt.s32.totalorder %s584, 31
      %s588 = scalar_select %p587, %s584, 31
      %s589 = smul.addr %s586, 32
      %s590 = sadd.s32 %s588, %s589
      %s591 = smul.addr %s590, 8
      %s592 = scalar_lea.vmem %s3, %s591
      // Predicated region
      $region33: #{conv_transp_block_forward.1} parent=31 // pred_check
        %p593 = pneg %p116
      $region34: #{conv_transp_block_forward.1} parent=31 // pred_check_branch
        %595 = sbr.rel (%p593) target = $region36
      $region35: #{conv_transp_block_forward.1} parent=31 // pred_region
        %s596 = smul.u32 32, %s19
      $region36: #{conv_transp_block_forward.1} parent=31 // pred_fallthru
        _
    $region32: #{conv_transp_block_forward.1} parent=5 // pred_fallthru
      _
    %p597 = scmp.le.s32.totalorder 2, %s9
    // Predicated region
    $region37: #{conv_transp_block_forward.1} parent=5 // pred_check
      %p598 = pneg %p597
    $region38: #{conv_transp_block_forward.1} parent=5 // pred_check_branch
      %600 = sbr.rel (%p598) target = $region40
    $region39: #{conv_transp_block_forward.1} parent=5 // pred_region
      %s601 = ssub.s32 %s9, 2
      // Predicated region
      $region41: #{conv_transp_block_forward.1} parent=39 // pred_check
        %p602 = pneg %p122
      $region42: #{conv_transp_block_forward.1} parent=39 // pred_check_branch
        %604 = sbr.rel (%p602) target = $region44
      $region43: #{conv_transp_block_forward.1} parent=39 // pred_region
        %s605 = smul.u32 32, %s21
        %p606 = scmp.lt.s32.totalorder %s20, 1
        %s607 = scalar_select %p606, %s20, 1
        %p608 = scmp.lt.s32.totalorder %s605, 31
        %s609 = scalar_select %p608, %s605, 31
        %s610 = smul.addr %s607, 32
        %s611 = sadd.s32 %s609, %s610
        %s612 = smul.addr %s611, 8
        %s613 = scalar_lea.vmem %s3, %s612
      $region44: #{conv_transp_block_forward.1} parent=39 // pred_fallthru
        _
    $region40: #{conv_transp_block_forward.1} parent=5 // pred_fallthru
      _
  $region6: #{conv_transp_block_forward.1} parent=0 // loop_footer
    %s13 = sadd.s32 1, %s9
  $region7: #{conv_transp_block_forward.1} parent=0 // loop_footer_branch
    %8 = sbr.rel target = $region3
  $region8: #{conv_transp_block_forward.1} parent=0 // loop_exit
    _

</llo_original>
